<compile_context>
chip_gen: v5e
topology: v5e:2x2
jax: 0.10.0
libtpu: 0.0.40
codegen_flags: <defaults>
</compile_context>

<pallas_src>
import functools

import jax
import jax.numpy as jnp
from jax.experimental import pallas as pl
from jax.experimental.pallas import tpu as pltpu

_LANE = 128
_SUBLANE = 8


def _heatmap_loss_kernel(pred_ref, gt_ref, out_ref, *, inv_n):
    k = pl.program_id(1)

    @pl.when(k == 0)
    def _():
        out_ref[...] = jnp.zeros_like(out_ref)

    # Widen in-register; inputs streamed in their native dtype.
    d = pred_ref[0].astype(jnp.float32) - gt_ref[0].astype(jnp.float32)
    sq = d * d
    # Fold the row axis onto a single (8, 128) tile with elementwise VPU adds
    # (tile-aligned reshape, no relayout); the cross-lane reduce happens once,
    # outside the kernel.
    out_ref[0] += jnp.sum(sq.reshape(-1, _SUBLANE, _LANE), axis=0)

    @pl.when(k == pl.num_programs(1) - 1)
    def _():
        out_ref[...] = out_ref[...] * inv_n  # constant multiply, not a divide


def heatmap_loss(pred, gt, *, input_buffer_budget_bytes=16 * 1024 * 1024):
    """pred, gt: (B, C, H, W) arrays. Returns per-batch MSE, shape (B,), f32."""
    assert pred.shape == gt.shape, (pred.shape, gt.shape)
    B, C, H, W = pred.shape
    N = C * H * W

    # Feature rows of 128 lanes, rounded up to a sublane multiple.
    rows = -(-N // _LANE)
    rows_aligned = -(-rows // _SUBLANE) * _SUBLANE

    # Tile budget: 2 inputs x 2 pipeline buffers x tile_bytes <= budget.
    itemsize = max(jnp.dtype(pred.dtype).itemsize, jnp.dtype(gt.dtype).itemsize)
    bytes_per_row = _LANE * itemsize
    max_tile_rows = max(
        _SUBLANE,
        (input_buffer_budget_bytes // (4 * bytes_per_row)) // _SUBLANE * _SUBLANE,
    )
    tile_rows = min(max_tile_rows, rows_aligned)  # tiny problems -> 1 grid step

    rows_padded = -(-rows_aligned // tile_rows) * tile_rows
    n_tiles = rows_padded // tile_rows
    n_padded = rows_padded * _LANE

    def to_blocks(x):
        x = x.reshape(B, N)
        if n_padded != N:
            # Zero-pad both inputs: padded lanes add (0 - 0)^2 = 0 to the sum.
            x = jnp.pad(x, ((0, 0), (0, n_padded - N)))
        return x.reshape(B, rows_padded, _LANE)

    pred3 = to_blocks(pred)
    gt3 = to_blocks(gt)

    kernel = functools.partial(_heatmap_loss_kernel, inv_n=1.0 / float(N))

    partial_sums = pl.pallas_call(
        kernel,
        out_shape=jax.ShapeDtypeStruct((B, _SUBLANE, _LANE), jnp.float32),
        grid_spec=pltpu.PrefetchScalarGridSpec(
            num_scalar_prefetch=0,
            grid=(B, n_tiles),  # batch is parallel; reduction axis is last
            in_specs=[
                pl.BlockSpec((1, tile_rows, _LANE), lambda b, k: (b, k, 0)),
                pl.BlockSpec((1, tile_rows, _LANE), lambda b, k: (b, k, 0)),
            ],
            out_specs=pl.BlockSpec((1, _SUBLANE, _LANE), lambda b, k: (b, 0, 0)),
        ),
        compiler_params=pltpu.CompilerParams(
            dimension_semantics=("parallel", "arbitrary"),
            vmem_limit_bytes=32 * 1024 * 1024,
        ),
    )(pred3, gt3)

    # One cheap cross-lane reduction per batch element (already scaled by 1/N).
    return partial_sums.sum(axis=(1, 2))


def heatmap_loss_ref(pred, gt):
    loss = (pred - gt) ** 2
    return loss.mean(axis=3).mean(axis=2).mean(axis=1)


if __name__ == "__main__":
    key = jax.random.PRNGKey(0)
    kp, kg = jax.random.split(key)
    B, C, H, W = 2, 4, 16, 16
    pred = jax.random.normal(kp, (B, C, H, W), dtype=jnp.float32)
    gt = jax.random.uniform(kg, (B, C, H, W), dtype=jnp.float32)

    out = heatmap_loss(pred, gt)
    out = jax.block_until_ready(out)

    ref = heatmap_loss_ref(pred, gt)
    assert out.shape == (B,)
    assert jnp.allclose(out, ref, rtol=1e-5, atol=1e-5), (out, ref)
    print("KERNEL_OK")
</pallas_src>

<mosaic_0001>
module attributes {stable_mosaic.version = 11 : i64} {
  func.func @_heatmap_loss_kernel(%arg0: i32, %arg1: i32, %arg2: memref<1x8x128xf32, #tpu.memory_space<vmem>>, %arg3: memref<1x8x128xf32, #tpu.memory_space<vmem>>, %arg4: memref<1x8x128xf32, #tpu.memory_space<vmem>>) attributes {dimension_semantics = [#tpu.dimension_semantics<parallel>, #tpu.dimension_semantics<arbitrary>], iteration_bounds = array<i64: 2, 1>, scalar_prefetch = 0 : i64, scratch_operands = 0 : i64, tpu.core_type = #tpu.core_type<tc>, window_params = [{transform_indices = @transform_0, window_bounds = array<i64: 1, 8, 128>}, {transform_indices = @transform_1, window_bounds = array<i64: 1, 8, 128>}, {transform_indices = @transform_2, window_bounds = array<i64: 1, 8, 128>}]} {
    %c0_i32 = arith.constant 0 : i32
    %0 = arith.cmpi eq, %arg1, %c0_i32 : i32
    %1 = arith.extui %0 : i1 to i32
    %c0_i32_0 = arith.constant 0 : i32
    %2 = arith.cmpi ne, %1, %c0_i32_0 : i32
    scf.if %2 {
      %cst_14 = arith.constant 0.000000e+00 : f32
      %20 = vector.broadcast %cst_14 : f32 to vector<1x8x128xf32>
      %c0_15 = arith.constant 0 : index
      %c0_16 = arith.constant 0 : index
      %c0_17 = arith.constant 0 : index
      %21 = vector.load %arg4[%c0_15, %c0_16, %c0_17] : memref<1x8x128xf32, #tpu.memory_space<vmem>>, vector<1x8x128xf32>
      tpu.vector_store %arg4[%c0_15, %c0_16, %c0_17], %20 {strides = array<i32>} : memref<1x8x128xf32, #tpu.memory_space<vmem>>, vector<1x8x128xf32>,
    } else {
    }
    %c0 = arith.constant 0 : index
    %c0_1 = arith.constant 0 : index
    %c0_2 = arith.constant 0 : index
    %3 = vector.load %arg2[%c0, %c0_1, %c0_2] : memref<1x8x128xf32, #tpu.memory_space<vmem>>, vector<1x8x128xf32>
    %4 = vector.shape_cast %3 : vector<1x8x128xf32> to vector<8x128xf32>
    %c0_3 = arith.constant 0 : index
    %c0_4 = arith.constant 0 : index
    %c0_5 = arith.constant 0 : index
    %5 = vector.load %arg3[%c0_3, %c0_4, %c0_5] : memref<1x8x128xf32, #tpu.memory_space<vmem>>, vector<1x8x128xf32>
    %6 = vector.shape_cast %5 : vector<1x8x128xf32> to vector<8x128xf32>
    %7 = arith.subf %4, %6 : vector<8x128xf32>
    %8 = arith.mulf %7, %7 : vector<8x128xf32>
    %c0_6 = arith.constant 0 : index
    %c0_7 = arith.constant 0 : index
    %c0_8 = arith.constant 0 : index
    %9 = vector.load %arg4[%c0_6, %c0_7, %c0_8] : memref<1x8x128xf32, #tpu.memory_space<vmem>>, vector<1x8x128xf32>
    %10 = vector.shape_cast %9 : vector<1x8x128xf32> to vector<8x128xf32>
    %11 = vector.shape_cast %8 : vector<8x128xf32> to vector<1x8x128xf32>
    %cst = arith.constant dense<0.000000e+00> : vector<8x128xf32>
    %12 = vector.multi_reduction <add>, %11, %cst [0] : vector<1x8x128xf32> to vector<8x128xf32>
    %13 = arith.addf %10, %12 : vector<8x128xf32>
    %c0_9 = arith.constant 0 : index
    %c0_10 = arith.constant 0 : index
    %c0_11 = arith.constant 0 : index
    %14 = vector.load %arg4[%c0_9, %c0_10, %c0_11] : memref<1x8x128xf32, #tpu.memory_space<vmem>>, vector<1x8x128xf32>
    %15 = vector.shape_cast %14 : vector<1x8x128xf32> to vector<8x128xf32>
    %16 = vector.shape_cast %13 : vector<8x128xf32> to vector<1x8x128xf32>
    tpu.vector_store %arg4[%c0_9, %c0_10, %c0_11], %16 {strides = array<i32>} : memref<1x8x128xf32, #tpu.memory_space<vmem>>, vector<1x8x128xf32>,
    %c0_i32_12 = arith.constant 0 : i32
    %17 = arith.cmpi eq, %arg1, %c0_i32_12 : i32
    %18 = arith.extui %17 : i1 to i32
    %c0_i32_13 = arith.constant 0 : i32
    %19 = arith.cmpi ne, %18, %c0_i32_13 : i32
    scf.if %19 {
      %c0_14 = arith.constant 0 : index
      %c0_15 = arith.constant 0 : index
      %c0_16 = arith.constant 0 : index
      %20 = vector.load %arg4[%c0_14, %c0_15, %c0_16] : memref<1x8x128xf32, #tpu.memory_space<vmem>>, vector<1x8x128xf32>
      %cst_17 = arith.constant 9.765625E-4 : f32
      %21 = vector.broadcast %cst_17 : f32 to vector<1x8x128xf32>
      %22 = arith.mulf %20, %21 : vector<1x8x128xf32>
      %c0_18 = arith.constant 0 : index
      %c0_19 = arith.constant 0 : index
      %c0_20 = arith.constant 0 : index
      %23 = vector.load %arg4[%c0_18, %c0_19, %c0_20] : memref<1x8x128xf32, #tpu.memory_space<vmem>>, vector<1x8x128xf32>
      tpu.vector_store %arg4[%c0_18, %c0_19, %c0_20], %22 {strides = array<i32>} : memref<1x8x128xf32, #tpu.memory_space<vmem>>, vector<1x8x128xf32>,
    } else {
    }
    return
  }
  func.func @transform_0(%arg0: i32, %arg1: i32) -> (i32, i32, i32) {
    %c0_i32 = arith.constant 0 : i32
    %c0_i32_0 = arith.constant 0 : i32
    return %arg0, %arg1, %c0_i32 : i32, i32, i32
  }
  func.func @transform_1(%arg0: i32, %arg1: i32) -> (i32, i32, i32) {
    %c0_i32 = arith.constant 0 : i32
    %c0_i32_0 = arith.constant 0 : i32
    return %arg0, %arg1, %c0_i32 : i32, i32, i32
  }
  func.func @transform_2(%arg0: i32, %arg1: i32) -> (i32, i32, i32) {
    %c0_i32 = arith.constant 0 : i32
    %c0_i32_0 = arith.constant 0 : i32
    %c0_i32_1 = arith.constant 0 : i32
    return %arg0, %c0_i32, %c0_i32_0 : i32, i32, i32
  }
}

</mosaic_0001>

<llo_original>
// kernel: tpu_custom_call.1
$region0: #{tpu_custom_call.1}
  #allocation0 [shape = 'u32[]', space=smem, size = 0x4, offset = 0x4, fixed_abs, tag = 'smem constant byte address 0x4 - core index']
  #allocation1 [shape = 'u32[72,128]{1,0:T(1,128)}', space=vmem, size = 0x9000, scoped, tag = 'internal scratch']
  %s0 = inlined_call_operand.hbm [shape: f32[2,8,128], index: 0, kind: input, shape index: {}]
  %s1 = inlined_call_operand.hbm [shape: f32[2,8,128], index: 1, kind: input, shape index: {}]
  %s2 = inlined_call_operand.hbm [shape: f32[2,8,128], index: 2, kind: output, shape index: {}]
  %s3 = sld [smem:[#allocation0]]
  $region57: #{tpu_custom_call.1} parent=0
    _
  %s5 = ssub.s32 1, %s3
  %s6 = scalar_select 0, %s5, %s3
  $region1: #{tpu_custom_call.1} parent=0
    #allocation2 [shape = 'u8[8192]{0}', space=vmem, size = 0x2000, scoped, tag = 'input window, operand 0']
    #allocation3 [shape = 's32[2]{0}', space=sflag, size = 0x8, scoped, tag = 'scoped memory for tpu_custom_call.1']
    #allocation4 [shape = 's32[2]{0}', space=sflag, size = 0x8, scoped, tag = 'scoped memory for tpu_custom_call.1']
    #allocation5 [shape = 'u8[8192]{0}', space=vmem, size = 0x2000, scoped, tag = 'input window, operand 1']
    #allocation6 [shape = 's32[2]{0}', space=sflag, size = 0x8, scoped, tag = 'scoped memory for tpu_custom_call.1']
    #allocation7 [shape = 'u8[8192]{0}', space=vmem, size = 0x2000, scoped, tag = 'output window, operand 0']
    %7 = vsyncpa [#allocation3], 0
    %s8 = scalar_lea.sflag [#allocation3], 1
    %9 = vsyncpa %s8, 0
    %10 = vsyncpa [#allocation6], 0
    %s11 = scalar_lea.sflag [#allocation6], 1
    %12 = vsyncpa %s11, 0
    %13 = vsyncpa [#allocation4], 0
    %s14 = scalar_lea.sflag [#allocation4], 1
    %15 = vsyncpa %s14, 0
    loop: start=0, step=1, limit=4
    $region2: #{tpu_custom_call.1} parent=1 // loop_pre_header
      _
    $region3: #{tpu_custom_call.1} parent=1 // loop_header
      %s17 = sphi 0, %s21
      %p18 = scmp.ge.s32.totalorder %s17, 4
      %s24 = sphi 0, %s36
      %s25 = sphi 0, %s32
      %s26 = sphi 0, %s24
      %s27 = sphi 0, %s25
      %s28 = sphi 0, %s26
      %s29 = sphi 0, %s27
      %s41 = sphi 0, %s43
      %s44 = sphi 0, %s41
      %s45 = sphi 0, %s44
      %s61 = sphi 0, %s45
      %s69 = sphi 0, %s71
      %s72 = sphi 0, %s69
      %s73 = sphi 0, %s72
      %s89 = sphi 0, %s73
      %s95 = sphi 0, %s97
      %s98 = sphi 0, %s95
      %s99 = sphi 0, %s98
      %s115 = sphi 0, %s99
    $region4: #{tpu_custom_call.1} parent=1 // loop_header_branch
      %20 = sbr.rel (%p18) target = $region8
    $region5: #{tpu_custom_call.1} parent=1 // loop_body
      %s22 = ssub.s32 %s17, 1
      %s23 = ssub.s32 %s17, 2
      %s30 = sadd.s32 1, %s25
      %p31 = scmp.ge.s32.totalorder %s30, 1
      %s32 = scalar_select %p31, 0, %s30
      %s33 = sadd.s32 1, %s24
      %s34 = scalar_select %p31, %s33, %s24
      %p35 = scmp.ge.s32.totalorder %s34, 2
      %s36 = scalar_select %p35, 0, %s34
      %s37 = ssub.s32 %s24, %s36
      %s38 = ssub.s32 %s25, %s32
      %s39 = sor.u32 %s37, %s38
      %p40 = scmp.eq.s32.totalorder %s39, 0
      %s42 = sadd.s32 %s41, 1
      %s43 = scalar_select %p40, %s41, %s42
      %p46 = pneg %p40
      %p47 = scmp.eq.s32.totalorder %s17, 1
      %p48 = por %p46, %p47
      %p49 = scmp.ne.s32.totalorder %s41, %s44
      %p50 = scmp.eq.s32.totalorder %s17, 0
      %p51 = por %p49, %p50
      %p52 = scmp.ne.s32.totalorder %s41, %s44
      %p53 = scmp.eq.s32.totalorder %s22, 1
      %p54 = por %p52, %p53
      %p55 = scmp.ne.s32.totalorder %s44, %s45
      %p56 = scmp.eq.s32.totalorder %s22, 0
      %p57 = por %p55, %p56
      %p58 = scmp.ne.s32.totalorder %s44, %s45
      %p59 = scmp.eq.s32.totalorder %s23, 1
      %p60 = por %p58, %p59
      %p62 = scmp.ne.s32.totalorder %s45, %s61
      %p63 = scmp.eq.s32.totalorder %s23, 0
      %p64 = por %p62, %p63
      %s65 = ssub.s32 %s24, %s36
      %s66 = ssub.s32 %s25, %s32
      %s67 = sor.u32 %s65, %s66
      %p68 = scmp.eq.s32.totalorder %s67, 0
      %s70 = sadd.s32 %s69, 1
      %s71 = scalar_select %p68, %s69, %s70
      %p74 = pneg %p68
      %p75 = scmp.eq.s32.totalorder %s17, 1
      %p76 = por %p74, %p75
      %p77 = scmp.ne.s32.totalorder %s69, %s72
      %p78 = scmp.eq.s32.totalorder %s17, 0
      %p79 = por %p77, %p78
      %p80 = scmp.ne.s32.totalorder %s69, %s72
      %p81 = scmp.eq.s32.totalorder %s22, 1
      %p82 = por %p80, %p81
      %p83 = scmp.ne.s32.totalorder %s72, %s73
      %p84 = scmp.eq.s32.totalorder %s22, 0
      %p85 = por %p83, %p84
      %p86 = scmp.ne.s32.totalorder %s72, %s73
      %p87 = scmp.eq.s32.totalorder %s23, 1
      %p88 = por %p86, %p87
      %p90 = scmp.ne.s32.totalorder %s73, %s89
      %p91 = scmp.eq.s32.totalorder %s23, 0
      %p92 = por %p90, %p91
      %s93 = ssub.s32 %s24, %s36
      %p94 = scmp.eq.s32.totalorder %s93, 0
      %s96 = sadd.s32 %s95, 1
      %s97 = scalar_select %p94, %s95, %s96
      %p100 = pneg %p94
      %p101 = scmp.eq.s32.totalorder %s17, 1
      %p102 = por %p100, %p101
      %p103 = scmp.ne.s32.totalorder %s95, %s98
      %p104 = scmp.eq.s32.totalorder %s17, 0
      %p105 = por %p103, %p104
      %p106 = scmp.ne.s32.totalorder %s95, %s98
      %p107 = scmp.eq.s32.totalorder %s22, 1
      %p108 = por %p106, %p107
      %p109 = scmp.ne.s32.totalorder %s98, %s99
      %p110 = scmp.eq.s32.totalorder %s22, 0
      %p111 = por %p109, %p110
      %p112 = scmp.ne.s32.totalorder %s98, %s99
      %p113 = scmp.eq.s32.totalorder %s23, 1
      %p114 = por %p112, %p113
      %p116 = scmp.ne.s32.totalorder %s99, %s115
      %p117 = scmp.eq.s32.totalorder %s23, 0
      %p118 = por %p116, %p117
      %p119 = scmp.le.s32.totalorder 1, %s17
      %p120 = scmp.lt.s32.totalorder %s17, 3
      %p121 = pnand %p119, %p120
      %p122 = pneg %p121
      // Predicated region
      $region9: #{tpu_custom_call.1} parent=5 // pred_check
        _
      $region10: #{tpu_custom_call.1} parent=5 // pred_check_branch
        %124 = sbr.rel (%p121) target = $region12
      $region11: #{tpu_custom_call.1} parent=5 // pred_region
        %s125 = ssub.s32 %s17, 1
      $region12: #{tpu_custom_call.1} parent=5 // pred_fallthru
        _
      %p126 = scmp.lt.s32.totalorder %s17, 2
      // Predicated region
      $region13: #{tpu_custom_call.1} parent=5 // pred_check
        %p127 = pneg %p126
      $region14: #{tpu_custom_call.1} parent=5 // pred_check_branch
        %129 = sbr.rel (%p127) target = $region16
      $region15: #{tpu_custom_call.1} parent=5 // pred_region
        // Predicated region
        $region17: #{tpu_custom_call.1} parent=15 // pred_check
          %p130 = pneg %p51
        $region18: #{tpu_custom_call.1} parent=15 // pred_check_branch
          %132 = sbr.rel (%p130) target = $region20
        $region19: #{tpu_custom_call.1} parent=15 // pred_region
          %s133 = sand.u32 %s41, 1
          %s134 = scalar_lea.sflag [#allocation3], %s133
          %s135 = sand.u32 %s41, 1
          %s136 = smul.addr %s135, 8
          %s137 = scalar_lea.vmem [#allocation2], %s136
          %139 = vsyncadd %s134, 0
          %s140 = sadd.s32 %s25, %s24
          %s141 = smul.addr %s140, 8
          %s142 = scalar_lea.hbm %s0, %s141
          %s144 = sshll.u32 %s142, 4
          %s145 = int_to_ptr.hbm [resolvable:$true] %s144
          %s146 = sshll.u32 %s137, 4
          %s147 = int_to_ptr.vmem [resolvable:$true] %s146
          %149 = dma.hbm_to_vmem [thread:$0]  %s145, 128, %s147, %s134
        $region20: #{tpu_custom_call.1} parent=15 // pred_fallthru
          _
        // Predicated region
        $region21: #{tpu_custom_call.1} parent=15 // pred_check
          %p150 = pneg %p79
        $region22: #{tpu_custom_call.1} parent=15 // pred_check_branch
          %152 = sbr.rel (%p150) target = $region24
        $region23: #{tpu_custom_call.1} parent=15 // pred_region
          %s153 = sand.u32 %s69, 1
          %s154 = scalar_lea.sflag [#allocation6], %s153
          %s155 = sand.u32 %s69, 1
          %s156 = smul.addr %s155, 8
          %s157 = scalar_lea.vmem [#allocation5], %s156
          %159 = vsyncadd %s154, 0
          %s160 = sadd.s32 %s25, %s24
          %s161 = smul.addr %s160, 8
          %s162 = scalar_lea.hbm %s1, %s161
          %s164 = sshll.u32 %s162, 4
          %s165 = int_to_ptr.hbm [resolvable:$true] %s164
          %s166 = sshll.u32 %s157, 4
          %s167 = int_to_ptr.vmem [resolvable:$true] %s166
          %169 = dma.hbm_to_vmem [thread:$0]  %s165, 128, %s167, %s154
        $region24: #{tpu_custom_call.1} parent=15 // pred_fallthru
          _
      $region16: #{tpu_custom_call.1} parent=5 // pred_fallthru
        _
      %p170 = scmp.le.s32.totalorder 1, %s17
      %p171 = scmp.lt.s32.totalorder %s17, 3
      %p172 = pnand %p170, %p171
      %p173 = pneg %p172
      // Predicated region
      $region25: #{tpu_custom_call.1} parent=5 // pred_check
        _
      $region26: #{tpu_custom_call.1} parent=5 // pred_check_branch
        %175 = sbr.rel (%p172) target = $region28
      $region27: #{tpu_custom_call.1} parent=5 // pred_region
        %s176 = ssub.s32 %s17, 1
        %s177 = sand.u32 %s44, 1
        %s178 = scalar_lea.sflag [#allocation3], %s177
        %s179 = sand.u32 %s44, 1
        %s180 = smul.addr %s179, 8
        %s181 = scalar_lea.vmem [#allocation2], %s180
        // Predicated region
        $region29: #{tpu_custom_call.1} parent=27 // pred_check
          %p182 = pneg %p57
        $region30: #{tpu_custom_call.1} parent=27 // pred_check_branch
          %184 = sbr.rel (%p182) target = $region32
        $region31: #{tpu_custom_call.1} parent=27 // pred_region
          %186 = dma.done %s178, 128
        $region32: #{tpu_custom_call.1} parent=27 // pred_fallthru
          _
        %s187 = sand.u32 %s72, 1
        %s188 = scalar_lea.sflag [#allocation6], %s187
        %s189 = sand.u32 %s72, 1
        %s190 = smul.addr %s189, 8
        %s191 = scalar_lea.vmem [#allocation5], %s190
        // Predicated region
        $region33: #{tpu_custom_call.1} parent=27 // pred_check
          %p192 = pneg %p85
        $region34: #{tpu_custom_call.1} parent=27 // pred_check_branch
          %194 = sbr.rel (%p192) target = $region36
        $region35: #{tpu_custom_call.1} parent=27 // pred_region
          %196 = dma.done %s188, 128
        $region36: #{tpu_custom_call.1} parent=27 // pred_fallthru
          _
        %s197 = sand.u32 %s44, 1
        %s198 = scalar_lea.sflag [#allocation3], %s197
        %s199 = sand.u32 %s44, 1
        %s200 = smul.addr %s199, 8
        %s201 = scalar_lea.vmem [#allocation2], %s200
        %p202 = pneg %p57
        %p203 = pneg %p54
        %s204 = sand.u32 %s72, 1
        %s205 = scalar_lea.sflag [#allocation6], %s204
        %s206 = sand.u32 %s72, 1
        %s207 = smul.addr %s206, 8
        %s208 = scalar_lea.vmem [#allocation5], %s207
        %p209 = pneg %p85
        %p210 = pneg %p82
        %p211 = pneg %p111
        %p212 = pneg %p108
        %s213 = sand.u32 %s98, 1
        %s214 = scalar_lea.sflag [#allocation4], %s213
        %s215 = sand.u32 %s98, 1
        %s216 = smul.addr %s215, 8
        %s217 = scalar_lea.vmem [#allocation7], %s216
        %p218 = scmp.eq.s32.totalorder %s27, 0
        // Predicated region
        $region37: #{tpu_custom_call.1} parent=27 // pred_check
          %p219 = pneg %p218
        $region38: #{tpu_custom_call.1} parent=27 // pred_check_branch
          %221 = sbr.rel (%p219) target = $region40
        $region39: #{tpu_custom_call.1} parent=27 // pred_region
          %222 = vst [vmem:[%s217] sm:$0xff] 0.0
        $region40: #{tpu_custom_call.1} parent=27 // pred_fallthru
          _
        %v223 = vld [vmem:[%s181] sm:$0xff]
        %v224 = vld [vmem:[%s191] sm:$0xff]
        %v225 = vsub.f32 %v223, %v224
        %v226 = vmul.f32 %v225, %v225
        %v227 = vld [vmem:[%s217] sm:$0xff]
        %v228 = vadd.f32 %v226, 0.0
        %v229 = vadd.f32 %v227, %v228
        %230 = vst [vmem:[%s217] sm:$0xff] %v229
        // Predicated region
        $region41: #{tpu_custom_call.1} parent=27 // pred_check
          %p231 = pneg %p218
        $region42: #{tpu_custom_call.1} parent=27 // pred_check_branch
          %233 = sbr.rel (%p231) target = $region44
        $region43: #{tpu_custom_call.1} parent=27 // pred_region
          %v234 = vld [vmem:[%s217] sm:$0xff]
          %v235 = vmul.f32 %v234, 0.0009765625
          %236 = vst [vmem:[%s217] sm:$0xff] %v235
        $region44: #{tpu_custom_call.1} parent=27 // pred_fallthru
          _
        %s237 = sand.u32 %s98, 1
        %s238 = scalar_lea.sflag [#allocation4], %s237
        %s239 = sand.u32 %s98, 1
        %s240 = smul.addr %s239, 8
        %s241 = scalar_lea.vmem [#allocation7], %s240
        // Predicated region
        $region45: #{tpu_custom_call.1} parent=27 // pred_check
          %p242 = pneg %p108
        $region46: #{tpu_custom_call.1} parent=27 // pred_check_branch
          %244 = sbr.rel (%p242) target = $region48
        $region47: #{tpu_custom_call.1} parent=27 // pred_region
          %246 = vsyncadd %s238, 0
          %s247 = smul.addr %s26, 8
          %s248 = scalar_lea.hbm %s2, %s247
          %s250 = sshll.u32 %s241, 4
          %s251 = int_to_ptr.vmem [resolvable:$true] %s250
          %s252 = sshll.u32 %s248, 4
          %s253 = int_to_ptr.hbm [resolvable:$true] %s252
          %255 = dma.vmem_to_hbm [thread:$0]  %s251, 128, %s253, %s238
        $region48: #{tpu_custom_call.1} parent=27 // pred_fallthru
          _
      $region28: #{tpu_custom_call.1} parent=5 // pred_fallthru
        _
      %p256 = scmp.le.s32.totalorder 2, %s17
      // Predicated region
      $region49: #{tpu_custom_call.1} parent=5 // pred_check
        %p257 = pneg %p256
      $region50: #{tpu_custom_call.1} parent=5 // pred_check_branch
        %259 = sbr.rel (%p257) target = $region52
      $region51: #{tpu_custom_call.1} parent=5 // pred_region
        %s260 = ssub.s32 %s17, 2
        // Predicated region
        $region53: #{tpu_custom_call.1} parent=51 // pred_check
          %p261 = pneg %p114
        $region54: #{tpu_custom_call.1} parent=51 // pred_check_branch
          %263 = sbr.rel (%p261) target = $region56
        $region55: #{tpu_custom_call.1} parent=51 // pred_region
          %s264 = sand.u32 %s99, 1
          %s265 = scalar_lea.sflag [#allocation4], %s264
          %s266 = sand.u32 %s99, 1
          %s267 = smul.addr %s266, 8
          %s268 = scalar_lea.vmem [#allocation7], %s267
          %270 = dma.done %s265, 128
        $region56: #{tpu_custom_call.1} parent=51 // pred_fallthru
          _
      $region52: #{tpu_custom_call.1} parent=5 // pred_fallthru
        _
    $region6: #{tpu_custom_call.1} parent=1 // loop_footer
      %s21 = sadd.s32 1, %s17
    $region7: #{tpu_custom_call.1} parent=1 // loop_footer_branch
      %16 = sbr.rel target = $region3
    $region8: #{tpu_custom_call.1} parent=1 // loop_exit
      _
    %271 = vsyncpa [#allocation3], 1
    %s272 = scalar_lea.sflag [#allocation3], 1
    %273 = vsyncpa %s272, 1
    %274 = vsyncpa [#allocation6], 1
    %s275 = scalar_lea.sflag [#allocation6], 1
    %276 = vsyncpa %s275, 1
    %277 = vsyncpa [#allocation4], 1
    %s278 = scalar_lea.sflag [#allocation4], 1
    %279 = vsyncpa %s278, 1

</llo_original>
